<compile_context>
chip_gen: v6e
topology: v6e:2x2x1
jax: 0.10.0
libtpu: 0.0.40
codegen_flags: <defaults>
</compile_context>

<pallas_src>
import functools
import math

import jax
import jax.numpy as jnp
from jax.experimental import pallas as pl
from jax.experimental.pallas import tpu as pltpu

_LANES = 128


def _dice_partial_kernel(x_ref, t_ref, inter_ref, total_ref, *,
                         rows, bm, blocks_per_split, needs_mask):
    """grid = (num_splits, steps_per_split).

    x_ref/t_ref:        (bm, 128) VMEM input tiles (any float/int dtype).
    inter_ref/total_ref:(1, 8, 128) f32 per-split partial sums; the blocks stay
                        resident across the inner "arbitrary" axis and are only
                        written back to HBM once per split.
    """
    c = pl.program_id(0)   # split index ("parallel": maps to a TC on v7x)
    i = pl.program_id(1)   # sequential reduction step inside the split

    @pl.when(i == 0)
    def _init():
        inter_ref[...] = jnp.zeros_like(inter_ref)
        total_ref[...] = jnp.zeros_like(total_ref)

    # Logical (unclamped) first row covered by this step; used only for masking.
    block_row0 = (c * blocks_per_split + i) * bm

    # Walk the big DMA tile in modest row chunks so in-kernel temporaries stay
    # a few hundred KiB even with multi-MiB input tiles.
    sub_rows = math.gcd(bm, 512)
    num_chunks = bm // sub_rows

    def body(j, carry):
        r0 = pl.multiple_of(j * sub_rows, sub_rows)
        x = x_ref[pl.ds(r0, sub_rows), :].astype(jnp.float32)
        t = t_ref[pl.ds(r0, sub_rows), :].astype(jnp.float32)
        if needs_mask:
            # Zero rows past the logical end of the flattened input (ragged
            # last block / duplicated clamped blocks). Statically skipped when
            # the grid tiles the rows exactly.
            rid = jax.lax.broadcasted_iota(jnp.int32, (sub_rows, _LANES), 0)
            valid = (rid + (block_row0 + r0)) < rows
            x = jnp.where(valid, x, 0.0)
            t = jnp.where(valid, t, 0.0)
        # vreg-wise adds into the resident (8,128) per-lane accumulators.
        inter_ref[0] += (x * t).reshape(sub_rows // 8, 8, _LANES).sum(axis=0)
        total_ref[0] += (x + t).reshape(sub_rows // 8, 8, _LANES).sum(axis=0)
        return carry

    jax.lax.fori_loop(0, num_chunks, body, 0)


def dice_loss(inputs, targets, smooth=1.0, *, block_rows=8192, num_splits=2):
    """Dice loss: 1 - (2*sum(x*t)+s) / (sum(x)+sum(t)+s) over flattened inputs.

    Operands are consumed in their incoming dtype (bf16/int8 welcome — bytes
    are time on this HBM-bound kernel); accumulation is always float32.
    """
    x = inputs.reshape(-1)
    t = targets.reshape(-1)
    n = x.shape[0]
    assert t.shape[0] == n, "inputs and targets must have the same element count"

    # Sublane granularity of the narrowest operand dtype (f32:8, bf16:16, i8:32).
    def _sub(dt):
        return max(8, 32 // jnp.dtype(dt).itemsize)
    sub = max(_sub(x.dtype), _sub(t.dtype))

    # Lane-dense 2-D layout (rows, 128), rows a multiple of the sublane tile.
    rows = pl.cdiv(n, _LANES)
    rows = ((rows + sub - 1) // sub) * sub
    pad = rows * _LANES - n
    if pad:
        # Only when n isn't a multiple of sub*128 (layout requirement); the
        # ragged *grid* tail is masked in-kernel, never padded here.
        x = jnp.pad(x, (0, pad))
        t = jnp.pad(t, (0, pad))
    x2 = x.reshape(rows, _LANES)       # pure view when pad == 0
    t2 = t.reshape(rows, _LANES)

    bm = min(block_rows, rows)
    bm = max(sub, (bm // sub) * sub)
    total_blocks = pl.cdiv(rows, bm)
    num_splits = max(1, min(num_splits, total_blocks))
    steps = pl.cdiv(total_blocks, num_splits)
    needs_mask = (num_splits * steps * bm) != rows

    def in_map(c, i):
        # Clamp so fully-out-of-range steps re-read a valid block; their
        # contribution is zeroed by the in-kernel row mask.
        return (jnp.minimum(c * steps + i, total_blocks - 1), 0)

    def out_map(c, i):
        return (c, 0, 0)

    # Double-buffered input tiles dominate VMEM; leave headroom for temporaries.
    buf_bytes = 2 * bm * _LANES * (x2.dtype.itemsize + t2.dtype.itemsize)
    vmem_limit = int(min(64 << 20, max(40 << 20, buf_bytes + (8 << 20))))

    kernel = functools.partial(_dice_partial_kernel, rows=rows, bm=bm,
                               blocks_per_split=steps, needs_mask=needs_mask)

    inter_p, total_p = pl.pallas_call(
        kernel,
        out_shape=(jax.ShapeDtypeStruct((num_splits, 8, _LANES), jnp.float32),
                   jax.ShapeDtypeStruct((num_splits, 8, _LANES), jnp.float32)),
        grid_spec=pltpu.PrefetchScalarGridSpec(
            num_scalar_prefetch=0,
            grid=(num_splits, steps),
            in_specs=[pl.BlockSpec((bm, _LANES), in_map),
                      pl.BlockSpec((bm, _LANES), in_map)],
            out_specs=[pl.BlockSpec((1, 8, _LANES), out_map),
                       pl.BlockSpec((1, 8, _LANES), out_map)],
        ),
        compiler_params=pltpu.CompilerParams(
            dimension_semantics=("parallel", "arbitrary"),
            vmem_limit_bytes=vmem_limit),
    )(x2, t2)

    # Two tiny scalar reductions + the dice epilogue in XLA.
    inter = jnp.sum(inter_p)
    total = jnp.sum(total_p)
    s = jnp.float32(smooth)
    return (1.0 - (2.0 * inter + s) / (total + s)).astype(jnp.float32)


def _ref_dice(inputs, targets, smooth=1.0):
    xf = inputs.astype(jnp.float32).reshape(-1)
    tf = targets.astype(jnp.float32).reshape(-1)
    inter = jnp.sum(xf * tf)
    return 1.0 - (2.0 * inter + smooth) / (jnp.sum(xf) + jnp.sum(tf) + smooth)


if __name__ == "__main__":
    key = jax.random.PRNGKey(0)
    k1, k2, k3, k4 = jax.random.split(key, 4)

    # Shapes consistent with the training loop: (N, C, H, W) probabilities vs
    # a same-shaped binary mask.
    shape = (2, 4, 16, 16)
    inputs = jax.nn.sigmoid(jax.random.normal(k1, shape, jnp.float32))
    targets = (jax.random.uniform(k2, shape) > 0.5).astype(jnp.float32)

    loss = jax.jit(dice_loss)(inputs, targets)
    jax.block_until_ready(loss)
    ref = _ref_dice(inputs, targets)
    assert loss.shape == () and loss.dtype == jnp.float32
    assert jnp.allclose(loss, ref, rtol=1e-5, atol=1e-5), (loss, ref)

    # bf16 operands: halves HBM traffic; kernel still accumulates in f32.
    loss_bf16 = jax.jit(dice_loss)(inputs.astype(jnp.bfloat16),
                                   targets.astype(jnp.bfloat16))
    jax.block_until_ready(loss_bf16)
    ref_bf16 = _ref_dice(inputs.astype(jnp.bfloat16), targets.astype(jnp.bfloat16))
    assert jnp.allclose(loss_bf16, ref_bf16, rtol=1e-3, atol=1e-3), (loss_bf16, ref_bf16)

    # Ragged stress case exercising the multi-split grid, block clamping and
    # the in-kernel tail mask (small block_rows to force several blocks).
    shape2 = (2, 3, 37, 41)
    x_r = jax.nn.sigmoid(jax.random.normal(k3, shape2, jnp.float32))
    t_r = (jax.random.uniform(k4, shape2) > 0.5).astype(jnp.float32)
    loss_r = jax.jit(functools.partial(dice_loss, block_rows=16, num_splits=2))(x_r, t_r)
    jax.block_until_ready(loss_r)
    ref_r = _ref_dice(x_r, t_r)
    assert jnp.allclose(loss_r, ref_r, rtol=1e-4, atol=1e-5), (loss_r, ref_r)

    print("KERNEL_OK")
</pallas_src>

<mosaic_0001>
module attributes {stable_mosaic.version = 11 : i64} {
  func.func @_dice_partial_kernel(%arg0: i32, %arg1: i32, %arg2: memref<16x128xf32, #tpu.memory_space<vmem>>, %arg3: memref<16x128xf32, #tpu.memory_space<vmem>>, %arg4: memref<1x8x128xf32, #tpu.memory_space<vmem>>, %arg5: memref<1x8x128xf32, #tpu.memory_space<vmem>>) attributes {dimension_semantics = [#tpu.dimension_semantics<parallel>, #tpu.dimension_semantics<arbitrary>], iteration_bounds = array<i64: 1, 1>, scalar_prefetch = 0 : i64, scratch_operands = 0 : i64, tpu.core_type = #tpu.core_type<tc>, window_params = [{transform_indices = @transform_0, window_bounds = array<i64: 16, 128>}, {transform_indices = @transform_1, window_bounds = array<i64: 16, 128>}, {transform_indices = @transform_2, window_bounds = array<i64: 1, 8, 128>}, {transform_indices = @transform_3, window_bounds = array<i64: 1, 8, 128>}]} {
    %c0_i32 = arith.constant 0 : i32
    %0 = arith.cmpi eq, %arg1, %c0_i32 : i32
    %1 = arith.extui %0 : i1 to i32
    %c0_i32_0 = arith.constant 0 : i32
    %2 = arith.cmpi ne, %1, %c0_i32_0 : i32
    scf.if %2 {
      %cst_16 = arith.constant 0.000000e+00 : f32
      %27 = vector.broadcast %cst_16 : f32 to vector<1x8x128xf32>
      %c0_17 = arith.constant 0 : index
      %c0_18 = arith.constant 0 : index
      %c0_19 = arith.constant 0 : index
      %28 = vector.load %arg4[%c0_17, %c0_18, %c0_19] : memref<1x8x128xf32, #tpu.memory_space<vmem>>, vector<1x8x128xf32>
      tpu.vector_store %arg4[%c0_17, %c0_18, %c0_19], %27 {strides = array<i32>} : memref<1x8x128xf32, #tpu.memory_space<vmem>>, vector<1x8x128xf32>,
      %cst_20 = arith.constant 0.000000e+00 : f32
      %29 = vector.broadcast %cst_20 : f32 to vector<1x8x128xf32>
      %c0_21 = arith.constant 0 : index
      %c0_22 = arith.constant 0 : index
      %c0_23 = arith.constant 0 : index
      %30 = vector.load %arg5[%c0_21, %c0_22, %c0_23] : memref<1x8x128xf32, #tpu.memory_space<vmem>>, vector<1x8x128xf32>
      tpu.vector_store %arg5[%c0_21, %c0_22, %c0_23], %29 {strides = array<i32>} : memref<1x8x128xf32, #tpu.memory_space<vmem>>, vector<1x8x128xf32>,
    } else {
    }
    %c0_i32_1 = arith.constant 0 : i32
    %c16_i32 = arith.constant 16 : i32
    %3 = arith.muli %c0_i32_1, %c16_i32 : i32
    %4 = tpu.assume_multiple %3, 16 : i32
    %5 = arith.index_cast %4 : i32 to index
    %c0 = arith.constant 0 : index
    %6 = vector.load %arg2[%5, %c0] : memref<16x128xf32, #tpu.memory_space<vmem>>, vector<16x128xf32>
    %7 = arith.index_cast %4 : i32 to index
    %c0_2 = arith.constant 0 : index
    %8 = vector.load %arg3[%7, %c0_2] : memref<16x128xf32, #tpu.memory_space<vmem>>, vector<16x128xf32>
    %c0_3 = arith.constant 0 : index
    %c0_4 = arith.constant 0 : index
    %c0_5 = arith.constant 0 : index
    %9 = vector.load %arg4[%c0_3, %c0_4, %c0_5] : memref<1x8x128xf32, #tpu.memory_space<vmem>>, vector<1x8x128xf32>
    %10 = vector.shape_cast %9 : vector<1x8x128xf32> to vector<8x128xf32>
    %11 = arith.mulf %6, %8 : vector<16x128xf32>
    %12 = vector.shape_cast %11 : vector<16x128xf32> to vector<2x8x128xf32>
    %cst = arith.constant dense<0.000000e+00> : vector<8x128xf32>
    %13 = vector.multi_reduction <add>, %12, %cst [0] : vector<2x8x128xf32> to vector<8x128xf32>
    %14 = arith.addf %10, %13 : vector<8x128xf32>
    %c0_6 = arith.constant 0 : index
    %c0_7 = arith.constant 0 : index
    %c0_8 = arith.constant 0 : index
    %15 = vector.load %arg4[%c0_6, %c0_7, %c0_8] : memref<1x8x128xf32, #tpu.memory_space<vmem>>, vector<1x8x128xf32>
    %16 = vector.shape_cast %15 : vector<1x8x128xf32> to vector<8x128xf32>
    %17 = vector.shape_cast %14 : vector<8x128xf32> to vector<1x8x128xf32>
    tpu.vector_store %arg4[%c0_6, %c0_7, %c0_8], %17 {strides = array<i32>} : memref<1x8x128xf32, #tpu.memory_space<vmem>>, vector<1x8x128xf32>,
    %c0_9 = arith.constant 0 : index
    %c0_10 = arith.constant 0 : index
    %c0_11 = arith.constant 0 : index
    %18 = vector.load %arg5[%c0_9, %c0_10, %c0_11] : memref<1x8x128xf32, #tpu.memory_space<vmem>>, vector<1x8x128xf32>
    %19 = vector.shape_cast %18 : vector<1x8x128xf32> to vector<8x128xf32>
    %20 = arith.addf %6, %8 : vector<16x128xf32>
    %21 = vector.shape_cast %20 : vector<16x128xf32> to vector<2x8x128xf32>
    %cst_12 = arith.constant dense<0.000000e+00> : vector<8x128xf32>
    %22 = vector.multi_reduction <add>, %21, %cst_12 [0] : vector<2x8x128xf32> to vector<8x128xf32>
    %23 = arith.addf %19, %22 : vector<8x128xf32>
    %c0_13 = arith.constant 0 : index
    %c0_14 = arith.constant 0 : index
    %c0_15 = arith.constant 0 : index
    %24 = vector.load %arg5[%c0_13, %c0_14, %c0_15] : memref<1x8x128xf32, #tpu.memory_space<vmem>>, vector<1x8x128xf32>
    %25 = vector.shape_cast %24 : vector<1x8x128xf32> to vector<8x128xf32>
    %26 = vector.shape_cast %23 : vector<8x128xf32> to vector<1x8x128xf32>
    tpu.vector_store %arg5[%c0_13, %c0_14, %c0_15], %26 {strides = array<i32>} : memref<1x8x128xf32, #tpu.memory_space<vmem>>, vector<1x8x128xf32>,
    %c1_i32 = arith.constant 1 : i32
    return
  }
  func.func @transform_0(%arg0: i32, %arg1: i32) -> (i32, i32) {
    %c1_i32 = arith.constant 1 : i32
    %0 = arith.muli %arg0, %c1_i32 : i32
    %1 = arith.addi %0, %arg1 : i32
    %c0_i32 = arith.constant 0 : i32
    %2 = arith.minsi %1, %c0_i32 : i32
    %c0_i32_0 = arith.constant 0 : i32
    %c0_i32_1 = arith.constant 0 : i32
    return %2, %c0_i32_0 : i32, i32
  }
  func.func @transform_1(%arg0: i32, %arg1: i32) -> (i32, i32) {
    %c1_i32 = arith.constant 1 : i32
    %0 = arith.muli %arg0, %c1_i32 : i32
    %1 = arith.addi %0, %arg1 : i32
    %c0_i32 = arith.constant 0 : i32
    %2 = arith.minsi %1, %c0_i32 : i32
    %c0_i32_0 = arith.constant 0 : i32
    %c0_i32_1 = arith.constant 0 : i32
    return %2, %c0_i32_0 : i32, i32
  }
  func.func @transform_2(%arg0: i32, %arg1: i32) -> (i32, i32, i32) {
    %c0_i32 = arith.constant 0 : i32
    %c0_i32_0 = arith.constant 0 : i32
    %c0_i32_1 = arith.constant 0 : i32
    return %arg0, %c0_i32, %c0_i32_0 : i32, i32, i32
  }
  func.func @transform_3(%arg0: i32, %arg1: i32) -> (i32, i32, i32) {
    %c0_i32 = arith.constant 0 : i32
    %c0_i32_0 = arith.constant 0 : i32
    %c0_i32_1 = arith.constant 0 : i32
    return %arg0, %c0_i32, %c0_i32_0 : i32, i32, i32
  }
}

</mosaic_0001>

<llo_original>
// kernel: dice_loss.1
$region0: #{dice_loss.1}
  #allocation0 [shape = 'u32[]', space=smem, size = 0x4, offset = 0x4, fixed_abs, tag = 'smem constant byte address 0x4 - core index']
  #allocation1 [shape = 'u32[144,128]{1,0:T(1,128)}', space=vmem, size = 0x12000, scoped, tag = 'internal scratch']
  %s0 = inlined_call_operand.vmem [shape: f32[16,128], index: 0, kind: input, shape index: {}]
  %s1 = inlined_call_operand.vmem [shape: f32[16,128], index: 1, kind: input, shape index: {}]
  %s2 = inlined_call_operand.vmem [shape: f32[1,8,128], index: 2, kind: output, shape index: {0}]
  %s3 = inlined_call_operand.vmem [shape: f32[1,8,128], index: 3, kind: output, shape index: {1}]
  %4 = xla_tuple %s2, %s3
  %s5 = sld [smem:[#allocation0]]
  $region30: #{dice_loss.1} parent=0
    _
  %s7 = ssub.s32 1, %s5
  %s8 = scalar_select 0, %s7, %s5
  // Predicated region
  $region2: #{dice_loss.1} parent=0 // pred_check
    _
  $region3: #{dice_loss.1} parent=0 // pred_check_branch
    %10 = sbr.rel (0) target = $region5
  $region4: #{dice_loss.1} parent=0 // pred_region
    %s11 = sadd.s32 0, 0
    %p12 = scmp.lt.s32.totalorder %s11, 0
    %s13 = scalar_select %p12, %s11, 0
    %s14 = smul.u32 2, %s13
    %p15 = scmp.lt.s32.totalorder %s14, 1
    %s16 = scalar_select %p15, %s14, 1
    %s17 = smul.addr %s16, 8
    %s18 = scalar_lea.vmem %s0, %s17
    %s19 = sadd.s32 0, 0
    %p20 = scmp.lt.s32.totalorder %s19, 0
    %s21 = scalar_select %p20, %s19, 0
    %s22 = smul.u32 2, %s21
  $region5: #{dice_loss.1} parent=0 // pred_fallthru
    _
  // Predicated region
  $region6: #{dice_loss.1} parent=0 // pred_check
    _
  $region7: #{dice_loss.1} parent=0 // pred_check_branch
    %24 = sbr.rel (0) target = $region9
  $region8: #{dice_loss.1} parent=0 // pred_region
    %s25 = sadd.s32 0, 0
    %p26 = scmp.lt.s32.totalorder %s25, 0
    %s27 = scalar_select %p26, %s25, 0
    %s28 = smul.u32 2, %s27
    %p29 = scmp.lt.s32.totalorder %s28, 1
    %s30 = scalar_select %p29, %s28, 1
    %s31 = smul.addr %s30, 8
    %s32 = scalar_lea.vmem %s1, %s31
    %s33 = sadd.s32 0, 0
    %p34 = scmp.lt.s32.totalorder %s33, 0
    %s35 = scalar_select %p34, %s33, 0
    %s36 = smul.u32 2, %s35
  $region9: #{dice_loss.1} parent=0 // pred_fallthru
    _
  %s37 = sadd.s32 0, 0
  %p38 = scmp.lt.s32.totalorder %s37, 0
  %s39 = scalar_select %p38, %s37, 0
  %s40 = smul.u32 2, %s39
  %p41 = scmp.lt.s32.totalorder %s40, 1
  %s42 = scalar_select %p41, %s40, 1
  %s43 = smul.addr %s42, 8
  %s44 = scalar_lea.vmem %s0, %s43
  %s45 = sadd.s32 0, 0
  %p46 = scmp.lt.s32.totalorder %s45, 0
  %s47 = scalar_select %p46, %s45, 0
  %s48 = smul.u32 2, %s47
  %p49 = scmp.lt.s32.totalorder %s48, 1
  %s50 = scalar_select %p49, %s48, 1
  %s51 = smul.addr %s50, 8
  %s52 = scalar_lea.vmem %s1, %s51
  %s53 = sadd.s32 0, 0
  %p54 = scmp.lt.s32.totalorder %s53, 0
  %s55 = scalar_select %p54, %s53, 0
  %s56 = smul.u32 2, %s55
  %p57 = scmp.lt.s32.totalorder %s56, 1
  %s58 = scalar_select %p57, %s56, 1
  %s59 = smul.addr %s58, 8
  %s60 = scalar_lea.vmem %s0, %s59
  %s61 = sadd.s32 0, 0
  %p62 = scmp.lt.s32.totalorder %s61, 0
  %s63 = scalar_select %p62, %s61, 0
  %s64 = smul.u32 2, %s63
  %s65 = sadd.s32 0, 0
  %p66 = scmp.lt.s32.totalorder %s65, 0
  %s67 = scalar_select %p66, %s65, 0
  %s68 = smul.u32 2, %s67
  %p69 = scmp.lt.s32.totalorder %s68, 1
  %s70 = scalar_select %p69, %s68, 1
  %s71 = smul.addr %s70, 8
  %s72 = scalar_lea.vmem %s1, %s71
  %s73 = sadd.s32 0, 0
  %p74 = scmp.lt.s32.totalorder %s73, 0
  %s75 = scalar_select %p74, %s73, 0
  %s76 = smul.u32 2, %s75
  %p77 = scmp.eq.s32.totalorder 0, 0
  // Predicated region
  $region10: #{dice_loss.1} parent=0 // pred_check
    %p78 = pneg %p77
  $region11: #{dice_loss.1} parent=0 // pred_check_branch
    %80 = sbr.rel (%p78) target = $region13
  $region12: #{dice_loss.1} parent=0 // pred_region
    %81 = vst [vmem:[%s2] sm:$0xff] 0.0
    %82 = vst [vmem:[%s3] sm:$0xff] 0.0
  $region13: #{dice_loss.1} parent=0 // pred_fallthru
    _
  %v83 = vld [vmem:[%s60] sm:$0xff]
  %v84 = vld [vmem:[%s60 + $0x8] sm:$0xff]
  %v85 = vld [vmem:[%s72] sm:$0xff]
  %v86 = vld [vmem:[%s72 + $0x8] sm:$0xff]
  %v87 = vld [vmem:[%s2] sm:$0xff]
  %v88 = vmul.f32 %v83, %v85
  %v89 = vmul.f32 %v84, %v86
  %v90 = vadd.f32 %v88, %v89
  %v91 = vadd.f32 %v87, %v90
  %92 = vst [vmem:[%s2] sm:$0xff] %v91
  %v93 = vld [vmem:[%s3] sm:$0xff]
  %v94 = vadd.f32 %v83, %v85
  %v95 = vadd.f32 %v84, %v86
  %v96 = vadd.f32 %v94, %v95
  %v97 = vadd.f32 %v93, %v96
  %98 = vst [vmem:[%s3] sm:$0xff] %v97
  // Predicated region
  $region14: #{dice_loss.1} parent=0 // pred_check
    _
  $region15: #{dice_loss.1} parent=0 // pred_check_branch
    %100 = sbr.rel (0) target = $region17
  $region16: #{dice_loss.1} parent=0 // pred_region
    _
  $region17: #{dice_loss.1} parent=0 // pred_fallthru
    _
  // Predicated region
  $region18: #{dice_loss.1} parent=0 // pred_check
    _
  $region19: #{dice_loss.1} parent=0 // pred_check_branch
    %102 = sbr.rel (0) target = $region21
  $region20: #{dice_loss.1} parent=0 // pred_region
    _
  $region21: #{dice_loss.1} parent=0 // pred_fallthru
    _
  // Predicated region
  $region22: #{dice_loss.1} parent=0 // pred_check
    _
  $region23: #{dice_loss.1} parent=0 // pred_check_branch
    %104 = sbr.rel (0) target = $region25
  $region24: #{dice_loss.1} parent=0 // pred_region
    _
  $region25: #{dice_loss.1} parent=0 // pred_fallthru
    _
  // Predicated region
  $region26: #{dice_loss.1} parent=0 // pred_check
    _
  $region27: #{dice_loss.1} parent=0 // pred_check_branch
    %106 = sbr.rel (0) target = $region29
  $region28: #{dice_loss.1} parent=0 // pred_region
    _
  $region29: #{dice_loss.1} parent=0 // pred_fallthru
    _

</llo_original>
